<compile_context>
chip_gen: v7x
topology: tpu7x:2x2x1
jax: 0.10.0
libtpu: 0.0.40
codegen_flags: <defaults>
</compile_context>

<pallas_src>
import functools

import jax
import jax.numpy as jnp
from jax.experimental import pallas as pl
from jax.experimental.pallas import tpu as pltpu


LEAKY_SLOPE = 0.01  # nn.LeakyReLU default negative_slope


def _leaky_relu(h):
    return jnp.where(h > 0, h, LEAKY_SLOPE * h)


def decoder_kernel(x_ref, w1_ref, b1_ref, w2_ref, b2_ref, w3_ref, b3_ref, dec_ref):
    """One N-tile of the decoder head: whole batch, channels on lanes."""
    x = x_ref[...]                                                     # (bz, L) bf16
    h = jnp.dot(x, w1_ref[...], preferred_element_type=jnp.float32) + b1_ref[...]
    h = _leaky_relu(h).astype(jnp.bfloat16)                            # (bz, F1)
    h = jnp.dot(h, w2_ref[...], preferred_element_type=jnp.float32) + b2_ref[...]
    h = _leaky_relu(h).astype(jnp.bfloat16)                            # (bz, F2)
    o = jnp.dot(h, w3_ref[...], preferred_element_type=jnp.float32) + b3_ref[...]
    dec_ref[...] = jax.nn.sigmoid(o)                                   # (bz, TN) f32


def ppv_kernel(x_ref, p1_ref, c1_ref, p2_ref, c2_ref, p3_ref, c3_ref, ppv_ref):
    """Pivot/central head for the whole batch in one shot."""
    g = jnp.dot(x_ref[...], p1_ref[...], preferred_element_type=jnp.float32) + c1_ref[...]
    g = _leaky_relu(g).astype(jnp.bfloat16)
    g = jnp.dot(g, p2_ref[...], preferred_element_type=jnp.float32) + c2_ref[...]
    g = _leaky_relu(g).astype(jnp.bfloat16)
    g = jnp.dot(g, p3_ref[...], preferred_element_type=jnp.float32) + c3_ref[...]
    ppv_ref[...] = jax.nn.sigmoid(g)                                   # (bz, 6) f32


def _pick_n_tile(n, target=512):
    """Largest multiple-of-128 divisor of n that is <= target; prefer >=2 steps."""
    if n % 128 != 0:
        return n  # fall back to one full-width block (still valid BlockSpec)
    cands = [t for t in range(128, n + 1, 128) if n % t == 0]
    small = [t for t in cands if t <= target]
    tile = max(small) if small else n
    if tile == n and n >= 256:
        halves = [t for t in cands if t <= n // 2]
        if halves:
            tile = max(halves)  # keep >= 2 parallel grid steps (v7x dual TC)
    return tile


@functools.partial(jax.jit, static_argnames=("output_pts",))
def decoder_fc_pvp(x, params, output_pts):
    """Forward of DecoderFCWithPVP (bn=False, with_conf=False).

    x: (bz, latent_dim) float32
    Returns (dec (bz, 3, output_pts), pivot_point (bz, 3), central_point (bz, 3)).
    """
    bz, L = x.shape
    P = output_pts
    N = 3 * P

    bf16 = lambda a: a.astype(jnp.bfloat16)
    xb = bf16(x)
    w1, w2, w3 = bf16(params["w1"]), bf16(params["w2"]), bf16(params["w3"])
    p1, p2, p3 = bf16(params["p1"]), bf16(params["p2"]), bf16(params["p3"])
    b1, b2, b3 = params["b1"], params["b2"], params["b3"]
    c1, c2, c3 = params["c1"], params["c2"], params["c3"]
    F1 = w1.shape[1]
    F2 = w2.shape[1]

    tn = _pick_n_tile(N)
    grid = (N // tn,)

    full = lambda shape: pl.BlockSpec(shape, lambda j: (0, 0))

    # ---- decoder head: grid over N tiles of the last (big) layer ----
    dec_flat = pl.pallas_call(
        decoder_kernel,
        out_shape=jax.ShapeDtypeStruct((bz, N), jnp.float32),
        grid_spec=pltpu.PrefetchScalarGridSpec(
            num_scalar_prefetch=0,
            grid=grid,
            in_specs=[
                full((bz, L)),                                # x (whole batch)
                full((L, F1)), full((1, F1)),                 # layer 1
                full((F1, F2)), full((1, F2)),                # layer 2
                pl.BlockSpec((F2, tn), lambda j: (0, j)),     # W3 N-tile
                pl.BlockSpec((1, tn), lambda j: (0, j)),      # b3 N-tile
            ],
            out_specs=pl.BlockSpec((bz, tn), lambda j: (0, j)),
        ),
        compiler_params=pltpu.CompilerParams(
            dimension_semantics=("parallel",),
            vmem_limit_bytes=4 * 1024 * 1024,
        ),
    )(xb, w1, b1, w2, b2, w3, b3)
    # Free row-major view, identical to torch's x.view((-1, 3, output_pts)).
    dec = dec_flat.reshape(bz, 3, P)

    # ---- ppv head: one shot for the whole batch ----
    ppv = pl.pallas_call(
        ppv_kernel,
        out_shape=jax.ShapeDtypeStruct((bz, 6), jnp.float32),
        grid=(1,),
        in_specs=[
            full((bz, L)),
            full((L, F1)), full((1, F1)),
            full((F1, F2)), full((1, F2)),
            full((F2, 6)), full((1, 6)),
        ],
        out_specs=pl.BlockSpec((bz, 6), lambda j: (0, 0)),
        compiler_params=pltpu.CompilerParams(
            dimension_semantics=("arbitrary",),
            vmem_limit_bytes=2 * 1024 * 1024,
        ),
    )(xb, p1, c1, p2, c2, p3, c3)

    pivot_point = ppv[:, :3]
    central_point = ppv[:, 3:]
    return dec, pivot_point, central_point


def make_params(key, latent_dim, n_features, output_pts):
    """Deterministic synthetic parameters matching the PyTorch module's shapes.

    nn.Linear weights are stored transposed as (in, out); biases as (1, out).
    """
    F1, F2 = n_features
    ks = jax.random.split(key, 12)
    u = lambda k, shape, s=0.1: jax.random.uniform(k, shape, jnp.float32, -s, s)
    return {
        # decoder head (self.model)
        "w1": u(ks[0], (latent_dim, F1)),
        "b1": u(ks[1], (1, F1)),
        "w2": u(ks[2], (F1, F2)),
        "b2": u(ks[3], (1, F2)),
        "w3": u(ks[4], (F2, output_pts * 3)),
        "b3": u(ks[5], (1, output_pts * 3)),
        # pivot / central head (self.model_ppv)
        "p1": u(ks[6], (latent_dim, F1)),
        "c1": u(ks[7], (1, F1)),
        "p2": u(ks[8], (F1, F2)),
        "c2": u(ks[9], (1, F2)),
        "p3": u(ks[10], (F2, 6)),
        "c3": u(ks[11], (1, 6)),
    }


def reference_forward(x, params):
    """Plain-JAX f32 reference replicating the PyTorch forward semantics."""
    h = _leaky_relu(x @ params["w1"] + params["b1"])
    h = _leaky_relu(h @ params["w2"] + params["b2"])
    dec = jax.nn.sigmoid(h @ params["w3"] + params["b3"])
    dec = dec.reshape(x.shape[0], 3, -1)                 # .view((-1, 3, P))
    g = _leaky_relu(x @ params["p1"] + params["c1"])
    g = _leaky_relu(g @ params["p2"] + params["c2"])
    ppv = jax.nn.sigmoid(g @ params["p3"] + params["c3"])
    return dec, ppv[:, :3], ppv[:, 3:]


if __name__ == "__main__":
    # Small shapes consistent with the module (defaults scaled down).
    batch = 2
    latent_dim = 32
    n_features = (64, 64)
    output_pts = 256        # decoder output last dim = 3*256 = 768 = 6*128 lanes

    key = jax.random.PRNGKey(0)
    k_params, k_x = jax.random.split(key)
    params = make_params(k_params, latent_dim, n_features, output_pts)
    x = jax.random.normal(k_x, (batch, latent_dim), jnp.float32)

    dec, pivot, central = decoder_fc_pvp(x, params, output_pts)
    jax.block_until_ready((dec, pivot, central))

    dec_ref, pivot_ref, central_ref = reference_forward(x, params)
    assert dec.shape == (batch, 3, output_pts)
    assert pivot.shape == (batch, 3) and central.shape == (batch, 3)
    # bf16 MXU operands (f32 accumulation) -> loosened tolerance vs f32 reference.
    assert jnp.allclose(dec, dec_ref, atol=2e-2)
    assert jnp.allclose(pivot, pivot_ref, atol=2e-2)
    assert jnp.allclose(central, central_ref, atol=2e-2)

    print("KERNEL_OK")
</pallas_src>

<mosaic_0001>
module attributes {stable_mosaic.version = 11 : i64} {
  func.func @decoder_kernel(%arg0: i32, %arg1: memref<2x32xbf16, #tpu.memory_space<vmem>>, %arg2: memref<32x64xbf16, #tpu.memory_space<vmem>>, %arg3: memref<1x64xf32, #tpu.memory_space<vmem>>, %arg4: memref<64x64xbf16, #tpu.memory_space<vmem>>, %arg5: memref<1x64xf32, #tpu.memory_space<vmem>>, %arg6: memref<64x384xbf16, #tpu.memory_space<vmem>>, %arg7: memref<1x384xf32, #tpu.memory_space<vmem>>, %arg8: memref<2x384xf32, #tpu.memory_space<vmem>>) attributes {dimension_semantics = [#tpu.dimension_semantics<parallel>], iteration_bounds = array<i64: 2>, scalar_prefetch = 0 : i64, scratch_operands = 0 : i64, tpu.core_type = #tpu.core_type<tc>, window_params = [{pipeline_mode = #tpu.pipeline_mode<synchronous>, transform_indices = @transform_0, window_bounds = array<i64: 2, 32>}, {pipeline_mode = #tpu.pipeline_mode<synchronous>, transform_indices = @transform_1, window_bounds = array<i64: 32, 64>}, {pipeline_mode = #tpu.pipeline_mode<synchronous>, transform_indices = @transform_2, window_bounds = array<i64: 1, 64>}, {pipeline_mode = #tpu.pipeline_mode<synchronous>, transform_indices = @transform_3, window_bounds = array<i64: 64, 64>}, {pipeline_mode = #tpu.pipeline_mode<synchronous>, transform_indices = @transform_4, window_bounds = array<i64: 1, 64>}, {transform_indices = @transform_5, window_bounds = array<i64: 64, 384>}, {transform_indices = @transform_6, window_bounds = array<i64: 1, 384>}, {transform_indices = @transform_7, window_bounds = array<i64: 2, 384>}]} {
    %c0 = arith.constant 0 : index
    %c0_0 = arith.constant 0 : index
    %0 = vector.load %arg1[%c0, %c0_0] : memref<2x32xbf16, #tpu.memory_space<vmem>>, vector<2x32xbf16>
    %c0_1 = arith.constant 0 : index
    %c0_2 = arith.constant 0 : index
    %1 = vector.load %arg2[%c0_1, %c0_2] : memref<32x64xbf16, #tpu.memory_space<vmem>>, vector<32x64xbf16>
    %cst = arith.constant dense<0.000000e+00> : vector<2x64xf32>
    %2 = tpu.matmul %0, %1, %cst {dimension_numbers = #tpu.dot_dimension_numbers<[1], [0], [0], [1], [0, 0, 1, 1], [], []>} : vector<2x32xbf16>, vector<32x64xbf16>, vector<2x64xf32> -> vector<2x64xf32>
    %c0_3 = arith.constant 0 : index
    %c0_4 = arith.constant 0 : index
    %3 = vector.load %arg3[%c0_3, %c0_4] : memref<1x64xf32, #tpu.memory_space<vmem>>, vector<1x64xf32>
    %4 = vector.broadcast %3 : vector<1x64xf32> to vector<2x64xf32>
    %5 = arith.addf %2, %4 : vector<2x64xf32>
    %cst_5 = arith.constant 0.000000e+00 : f32
    %6 = vector.broadcast %cst_5 : f32 to vector<2x64xf32>
    %7 = arith.cmpf ogt, %5, %6 : vector<2x64xf32>
    %cst_6 = arith.constant 0.00999999977 : f32
    %8 = vector.broadcast %cst_6 : f32 to vector<2x64xf32>
    %9 = arith.mulf %8, %5 : vector<2x64xf32>
    %10 = arith.select %7, %5, %9 : vector<2x64xi1>, vector<2x64xf32>
    %11 = arith.truncf %10 : vector<2x64xf32> to vector<2x64xbf16>
    %c0_7 = arith.constant 0 : index
    %c0_8 = arith.constant 0 : index
    %12 = vector.load %arg4[%c0_7, %c0_8] : memref<64x64xbf16, #tpu.memory_space<vmem>>, vector<64x64xbf16>
    %cst_9 = arith.constant dense<0.000000e+00> : vector<2x64xf32>
    %13 = tpu.matmul %11, %12, %cst_9 {dimension_numbers = #tpu.dot_dimension_numbers<[1], [0], [0], [1], [0, 0, 1, 1], [], []>} : vector<2x64xbf16>, vector<64x64xbf16>, vector<2x64xf32> -> vector<2x64xf32>
    %c0_10 = arith.constant 0 : index
    %c0_11 = arith.constant 0 : index
    %14 = vector.load %arg5[%c0_10, %c0_11] : memref<1x64xf32, #tpu.memory_space<vmem>>, vector<1x64xf32>
    %15 = vector.broadcast %14 : vector<1x64xf32> to vector<2x64xf32>
    %16 = arith.addf %13, %15 : vector<2x64xf32>
    %cst_12 = arith.constant 0.000000e+00 : f32
    %17 = vector.broadcast %cst_12 : f32 to vector<2x64xf32>
    %18 = arith.cmpf ogt, %16, %17 : vector<2x64xf32>
    %cst_13 = arith.constant 0.00999999977 : f32
    %19 = vector.broadcast %cst_13 : f32 to vector<2x64xf32>
    %20 = arith.mulf %19, %16 : vector<2x64xf32>
    %21 = arith.select %18, %16, %20 : vector<2x64xi1>, vector<2x64xf32>
    %22 = arith.truncf %21 : vector<2x64xf32> to vector<2x64xbf16>
    %c0_14 = arith.constant 0 : index
    %c0_15 = arith.constant 0 : index
    %23 = vector.load %arg6[%c0_14, %c0_15] : memref<64x384xbf16, #tpu.memory_space<vmem>>, vector<64x384xbf16>
    %cst_16 = arith.constant dense<0.000000e+00> : vector<2x384xf32>
    %24 = tpu.matmul %22, %23, %cst_16 {dimension_numbers = #tpu.dot_dimension_numbers<[1], [0], [0], [1], [0, 0, 1, 1], [], []>} : vector<2x64xbf16>, vector<64x384xbf16>, vector<2x384xf32> -> vector<2x384xf32>
    %c0_17 = arith.constant 0 : index
    %c0_18 = arith.constant 0 : index
    %25 = vector.load %arg7[%c0_17, %c0_18] : memref<1x384xf32, #tpu.memory_space<vmem>>, vector<1x384xf32>
    %26 = vector.broadcast %25 : vector<1x384xf32> to vector<2x384xf32>
    %27 = arith.addf %24, %26 : vector<2x384xf32>
    %28 = arith.negf %27 : vector<2x384xf32>
    %29 = math.exp %28 : vector<2x384xf32>
    %cst_19 = arith.constant 1.000000e+00 : f32
    %30 = vector.broadcast %cst_19 : f32 to vector<2x384xf32>
    %31 = arith.addf %30, %29 : vector<2x384xf32>
    %32 = arith.divf %30, %31 : vector<2x384xf32>
    %c0_20 = arith.constant 0 : index
    %c0_21 = arith.constant 0 : index
    %33 = vector.load %arg8[%c0_20, %c0_21] : memref<2x384xf32, #tpu.memory_space<vmem>>, vector<2x384xf32>
    tpu.vector_store %arg8[%c0_20, %c0_21], %32 {strides = array<i32>} : memref<2x384xf32, #tpu.memory_space<vmem>>, vector<2x384xf32>,
    return
  }
  func.func @transform_0(%arg0: i32) -> (i32, i32) {
    %c0_i32 = arith.constant 0 : i32
    %c0_i32_0 = arith.constant 0 : i32
    %c0_i32_1 = arith.constant 0 : i32
    return %c0_i32, %c0_i32_0 : i32, i32
  }
  func.func @transform_1(%arg0: i32) -> (i32, i32) {
    %c0_i32 = arith.constant 0 : i32
    %c0_i32_0 = arith.constant 0 : i32
    %c0_i32_1 = arith.constant 0 : i32
    return %c0_i32, %c0_i32_0 : i32, i32
  }
  func.func @transform_2(%arg0: i32) -> (i32, i32) {
    %c0_i32 = arith.constant 0 : i32
    %c0_i32_0 = arith.constant 0 : i32
    %c0_i32_1 = arith.constant 0 : i32
    return %c0_i32, %c0_i32_0 : i32, i32
  }
  func.func @transform_3(%arg0: i32) -> (i32, i32) {
    %c0_i32 = arith.constant 0 : i32
    %c0_i32_0 = arith.constant 0 : i32
    %c0_i32_1 = arith.constant 0 : i32
    return %c0_i32, %c0_i32_0 : i32, i32
  }
  func.func @transform_4(%arg0: i32) -> (i32, i32) {
    %c0_i32 = arith.constant 0 : i32
    %c0_i32_0 = arith.constant 0 : i32
    %c0_i32_1 = arith.constant 0 : i32
    return %c0_i32, %c0_i32_0 : i32, i32
  }
  func.func @transform_5(%arg0: i32) -> (i32, i32) {
    %c0_i32 = arith.constant 0 : i32
    %c0_i32_0 = arith.constant 0 : i32
    return %c0_i32, %arg0 : i32, i32
  }
  func.func @transform_6(%arg0: i32) -> (i32, i32) {
    %c0_i32 = arith.constant 0 : i32
    %c0_i32_0 = arith.constant 0 : i32
    return %c0_i32, %arg0 : i32, i32
  }
  func.func @transform_7(%arg0: i32) -> (i32, i32) {
    %c0_i32 = arith.constant 0 : i32
    %c0_i32_0 = arith.constant 0 : i32
    return %c0_i32, %arg0 : i32, i32
  }
}

module attributes {stable_mosaic.version = 11 : i64} {
  func.func @ppv_kernel(%arg0: i32, %arg1: memref<2x32xbf16, #tpu.memory_space<vmem>>, %arg2: memref<32x64xbf16, #tpu.memory_space<vmem>>, %arg3: memref<1x64xf32, #tpu.memory_space<vmem>>, %arg4: memref<64x64xbf16, #tpu.memory_space<vmem>>, %arg5: memref<1x64xf32, #tpu.memory_space<vmem>>, %arg6: memref<64x6xbf16, #tpu.memory_space<vmem>>, %arg7: memref<1x6xf32, #tpu.memory_space<vmem>>, %arg8: memref<2x6xf32, #tpu.memory_space<vmem>>) attributes {dimension_semantics = [#tpu.dimension_semantics<arbitrary>], iteration_bounds = array<i64: 1>, scalar_prefetch = 0 : i64, scratch_operands = 0 : i64, tpu.core_type = #tpu.core_type<tc>, window_params = [{pipeline_mode = #tpu.pipeline_mode<synchronous>, transform_indices = @transform_0, window_bounds = array<i64: 2, 32>}, {pipeline_mode = #tpu.pipeline_mode<synchronous>, transform_indices = @transform_1, window_bounds = array<i64: 32, 64>}, {pipeline_mode = #tpu.pipeline_mode<synchronous>, transform_indices = @transform_2, window_bounds = array<i64: 1, 64>}, {pipeline_mode = #tpu.pipeline_mode<synchronous>, transform_indices = @transform_3, window_bounds = array<i64: 64, 64>}, {pipeline_mode = #tpu.pipeline_mode<synchronous>, transform_indices = @transform_4, window_bounds = array<i64: 1, 64>}, {pipeline_mode = #tpu.pipeline_mode<synchronous>, transform_indices = @transform_5, window_bounds = array<i64: 64, 6>}, {pipeline_mode = #tpu.pipeline_mode<synchronous>, transform_indices = @transform_6, window_bounds = array<i64: 1, 6>}, {pipeline_mode = #tpu.pipeline_mode<synchronous>, transform_indices = @transform_7, window_bounds = array<i64: 2, 6>}]} {
    %c0 = arith.constant 0 : index
    %c0_0 = arith.constant 0 : index
    %0 = vector.load %arg1[%c0, %c0_0] : memref<2x32xbf16, #tpu.memory_space<vmem>>, vector<2x32xbf16>
    %c0_1 = arith.constant 0 : index
    %c0_2 = arith.constant 0 : index
    %1 = vector.load %arg2[%c0_1, %c0_2] : memref<32x64xbf16, #tpu.memory_space<vmem>>, vector<32x64xbf16>
    %cst = arith.constant dense<0.000000e+00> : vector<2x64xf32>
    %2 = tpu.matmul %0, %1, %cst {dimension_numbers = #tpu.dot_dimension_numbers<[1], [0], [0], [1], [0, 0, 1, 1], [], []>} : vector<2x32xbf16>, vector<32x64xbf16>, vector<2x64xf32> -> vector<2x64xf32>
    %c0_3 = arith.constant 0 : index
    %c0_4 = arith.constant 0 : index
    %3 = vector.load %arg3[%c0_3, %c0_4] : memref<1x64xf32, #tpu.memory_space<vmem>>, vector<1x64xf32>
    %4 = vector.broadcast %3 : vector<1x64xf32> to vector<2x64xf32>
    %5 = arith.addf %2, %4 : vector<2x64xf32>
    %cst_5 = arith.constant 0.000000e+00 : f32
    %6 = vector.broadcast %cst_5 : f32 to vector<2x64xf32>
    %7 = arith.cmpf ogt, %5, %6 : vector<2x64xf32>
    %cst_6 = arith.constant 0.00999999977 : f32
    %8 = vector.broadcast %cst_6 : f32 to vector<2x64xf32>
    %9 = arith.mulf %8, %5 : vector<2x64xf32>
    %10 = arith.select %7, %5, %9 : vector<2x64xi1>, vector<2x64xf32>
    %11 = arith.truncf %10 : vector<2x64xf32> to vector<2x64xbf16>
    %c0_7 = arith.constant 0 : index
    %c0_8 = arith.constant 0 : index
    %12 = vector.load %arg4[%c0_7, %c0_8] : memref<64x64xbf16, #tpu.memory_space<vmem>>, vector<64x64xbf16>
    %cst_9 = arith.constant dense<0.000000e+00> : vector<2x64xf32>
    %13 = tpu.matmul %11, %12, %cst_9 {dimension_numbers = #tpu.dot_dimension_numbers<[1], [0], [0], [1], [0, 0, 1, 1], [], []>} : vector<2x64xbf16>, vector<64x64xbf16>, vector<2x64xf32> -> vector<2x64xf32>
    %c0_10 = arith.constant 0 : index
    %c0_11 = arith.constant 0 : index
    %14 = vector.load %arg5[%c0_10, %c0_11] : memref<1x64xf32, #tpu.memory_space<vmem>>, vector<1x64xf32>
    %15 = vector.broadcast %14 : vector<1x64xf32> to vector<2x64xf32>
    %16 = arith.addf %13, %15 : vector<2x64xf32>
    %cst_12 = arith.constant 0.000000e+00 : f32
    %17 = vector.broadcast %cst_12 : f32 to vector<2x64xf32>
    %18 = arith.cmpf ogt, %16, %17 : vector<2x64xf32>
    %cst_13 = arith.constant 0.00999999977 : f32
    %19 = vector.broadcast %cst_13 : f32 to vector<2x64xf32>
    %20 = arith.mulf %19, %16 : vector<2x64xf32>
    %21 = arith.select %18, %16, %20 : vector<2x64xi1>, vector<2x64xf32>
    %22 = arith.truncf %21 : vector<2x64xf32> to vector<2x64xbf16>
    %c0_14 = arith.constant 0 : index
    %c0_15 = arith.constant 0 : index
    %23 = vector.load %arg6[%c0_14, %c0_15] : memref<64x6xbf16, #tpu.memory_space<vmem>>, vector<64x6xbf16>
    %cst_16 = arith.constant dense<0.000000e+00> : vector<2x6xf32>
    %24 = tpu.matmul %22, %23, %cst_16 {dimension_numbers = #tpu.dot_dimension_numbers<[1], [0], [0], [1], [0, 0, 1, 1], [], []>} : vector<2x64xbf16>, vector<64x6xbf16>, vector<2x6xf32> -> vector<2x6xf32>
    %c0_17 = arith.constant 0 : index
    %c0_18 = arith.constant 0 : index
    %25 = vector.load %arg7[%c0_17, %c0_18] : memref<1x6xf32, #tpu.memory_space<vmem>>, vector<1x6xf32>
    %26 = vector.broadcast %25 : vector<1x6xf32> to vector<2x6xf32>
    %27 = arith.addf %24, %26 : vector<2x6xf32>
    %28 = arith.negf %27 : vector<2x6xf32>
    %29 = math.exp %28 : vector<2x6xf32>
    %cst_19 = arith.constant 1.000000e+00 : f32
    %30 = vector.broadcast %cst_19 : f32 to vector<2x6xf32>
    %31 = arith.addf %30, %29 : vector<2x6xf32>
    %32 = arith.divf %30, %31 : vector<2x6xf32>
    %c0_20 = arith.constant 0 : index
    %c0_21 = arith.constant 0 : index
    %33 = vector.load %arg8[%c0_20, %c0_21] : memref<2x6xf32, #tpu.memory_space<vmem>>, vector<2x6xf32>
    tpu.vector_store %arg8[%c0_20, %c0_21], %32 {strides = array<i32>} : memref<2x6xf32, #tpu.memory_space<vmem>>, vector<2x6xf32>,
    return
  }
  func.func @transform_0(%arg0: i32) -> (i32, i32) {
    %c0_i32 = arith.constant 0 : i32
    %c0_i32_0 = arith.constant 0 : i32
    %c0_i32_1 = arith.constant 0 : i32
    return %c0_i32, %c0_i32_0 : i32, i32
  }
  func.func @transform_1(%arg0: i32) -> (i32, i32) {
    %c0_i32 = arith.constant 0 : i32
    %c0_i32_0 = arith.constant 0 : i32
    %c0_i32_1 = arith.constant 0 : i32
    return %c0_i32, %c0_i32_0 : i32, i32
  }
  func.func @transform_2(%arg0: i32) -> (i32, i32) {
    %c0_i32 = arith.constant 0 : i32
    %c0_i32_0 = arith.constant 0 : i32
    %c0_i32_1 = arith.constant 0 : i32
    return %c0_i32, %c0_i32_0 : i32, i32
  }
  func.func @transform_3(%arg0: i32) -> (i32, i32) {
    %c0_i32 = arith.constant 0 : i32
    %c0_i32_0 = arith.constant 0 : i32
    %c0_i32_1 = arith.constant 0 : i32
    return %c0_i32, %c0_i32_0 : i32, i32
  }
  func.func @transform_4(%arg0: i32) -> (i32, i32) {
    %c0_i32 = arith.constant 0 : i32
    %c0_i32_0 = arith.constant 0 : i32
    %c0_i32_1 = arith.constant 0 : i32
    return %c0_i32, %c0_i32_0 : i32, i32
  }
  func.func @transform_5(%arg0: i32) -> (i32, i32) {
    %c0_i32 = arith.constant 0 : i32
    %c0_i32_0 = arith.constant 0 : i32
    %c0_i32_1 = arith.constant 0 : i32
    return %c0_i32, %c0_i32_0 : i32, i32
  }
  func.func @transform_6(%arg0: i32) -> (i32, i32) {
    %c0_i32 = arith.constant 0 : i32
    %c0_i32_0 = arith.constant 0 : i32
    %c0_i32_1 = arith.constant 0 : i32
    return %c0_i32, %c0_i32_0 : i32, i32
  }
  func.func @transform_7(%arg0: i32) -> (i32, i32) {
    %c0_i32 = arith.constant 0 : i32
    %c0_i32_0 = arith.constant 0 : i32
    %c0_i32_1 = arith.constant 0 : i32
    return %c0_i32, %c0_i32_0 : i32, i32
  }
}

</mosaic_0001>

<llo_original>
// kernel: decoder_fc_pvp.3
$region0: #{decoder_fc_pvp.3}
  #allocation0 [shape = 'u32[]', space=smem, size = 0x4, offset = 0x4, fixed_abs, tag = 'smem constant byte address 0x4 - core index']
  #allocation1 [shape = 'u32[144,128]{1,0:T(1,128)}', space=vmem, size = 0x12000, scoped, tag = 'internal scratch']
  %s0 = inlined_call_operand.vmem [shape: bf16[2,32], index: 0, kind: input, shape index: {}]
  %s1 = inlined_call_operand.vmem [shape: bf16[32,64], index: 1, kind: input, shape index: {}]
  %s2 = inlined_call_operand.vmem [shape: f32[1,64], index: 2, kind: input, shape index: {}]
  %s3 = inlined_call_operand.vmem [shape: bf16[64,64], index: 3, kind: input, shape index: {}]
  %s4 = inlined_call_operand.vmem [shape: f32[1,64], index: 4, kind: input, shape index: {}]
  %s5 = inlined_call_operand.vmem [shape: bf16[64,6], index: 5, kind: input, shape index: {}]
  %s6 = inlined_call_operand.vmem [shape: f32[1,6], index: 6, kind: input, shape index: {}]
  %s7 = inlined_call_operand.vmem [shape: f32[2,6], index: 7, kind: output, shape index: {}]
  %s8 = sld [smem:[#allocation0]]
  $region38: #{decoder_fc_pvp.3} parent=0
    _
  %s10 = ssub.s32 1, %s8
  %s11 = scalar_select 0, %s10, %s8
  // Predicated region
  $region2: #{decoder_fc_pvp.3} parent=0 // pred_check
    _
  $region3: #{decoder_fc_pvp.3} parent=0 // pred_check_branch
    %13 = sbr.rel (0) target = $region5
  $region4: #{decoder_fc_pvp.3} parent=0 // pred_region
    _
  $region5: #{decoder_fc_pvp.3} parent=0 // pred_fallthru
    _
  // Predicated region
  $region6: #{decoder_fc_pvp.3} parent=0 // pred_check
    _
  $region7: #{decoder_fc_pvp.3} parent=0 // pred_check_branch
    %15 = sbr.rel (0) target = $region9
  $region8: #{decoder_fc_pvp.3} parent=0 // pred_region
    _
  $region9: #{decoder_fc_pvp.3} parent=0 // pred_fallthru
    _
  // Predicated region
  $region10: #{decoder_fc_pvp.3} parent=0 // pred_check
    _
  $region11: #{decoder_fc_pvp.3} parent=0 // pred_check_branch
    %17 = sbr.rel (0) target = $region13
  $region12: #{decoder_fc_pvp.3} parent=0 // pred_region
    _
  $region13: #{decoder_fc_pvp.3} parent=0 // pred_fallthru
    _
  // Predicated region
  $region14: #{decoder_fc_pvp.3} parent=0 // pred_check
    _
  $region15: #{decoder_fc_pvp.3} parent=0 // pred_check_branch
    %19 = sbr.rel (0) target = $region17
  $region16: #{decoder_fc_pvp.3} parent=0 // pred_region
    _
  $region17: #{decoder_fc_pvp.3} parent=0 // pred_fallthru
    _
  // Predicated region
  $region18: #{decoder_fc_pvp.3} parent=0 // pred_check
    _
  $region19: #{decoder_fc_pvp.3} parent=0 // pred_check_branch
    %21 = sbr.rel (0) target = $region21
  $region20: #{decoder_fc_pvp.3} parent=0 // pred_region
    _
  $region21: #{decoder_fc_pvp.3} parent=0 // pred_fallthru
    _
  // Predicated region
  $region22: #{decoder_fc_pvp.3} parent=0 // pred_check
    _
  $region23: #{decoder_fc_pvp.3} parent=0 // pred_check_branch
    %23 = sbr.rel (0) target = $region25
  $region24: #{decoder_fc_pvp.3} parent=0 // pred_region
    _
  $region25: #{decoder_fc_pvp.3} parent=0 // pred_fallthru
    _
  // Predicated region
  $region26: #{decoder_fc_pvp.3} parent=0 // pred_check
    _
  $region27: #{decoder_fc_pvp.3} parent=0 // pred_check_branch
    %25 = sbr.rel (0) target = $region29
  $region28: #{decoder_fc_pvp.3} parent=0 // pred_region
    _
  $region29: #{decoder_fc_pvp.3} parent=0 // pred_fallthru
    _
  %v27 = vld [vmem:[%s0] sm:$0x1]
  %v28 = vld [vmem:[%s1] sm:$0xf]
  %v29 = vld [vmem:[%s1 + $0x4] sm:$0xf]
  %v30 = vld [vmem:[%s1 + $0x8] sm:$0xf]
  %v31 = vld [vmem:[%s1 + $0xc] sm:$0xf]
  %v32 = vld [vmem:[%s2] sm:$0x1]
  %v34 = vlaneseq
  %v35 = vshrl.u32 %v34, 7
  %v36 = vsub.s32 0, %v35
  %v37 = vrot.slane %v32, %v36
  %v43 = vunpack.c.l.b16 %v28
  %v44 = vunpack.c.l.b16 %v29
  %v45 = vunpack.c.l.b16 %v30
  %v46 = vunpack.c.l.b16 %v31
  %v47 = vpack.c.b16 %v44, %v43
  %v48 = vpack.c.b16 %v46, %v45
  %vm51 = vcmask 261120
  %v53 = vsel %vm51, %v27, 0
  %55 = vmatprep.subr.bf16.mxu0 0
  %56 = vmatpush1.bf16.msra.mxu0 %v47
  %57 = vmatprep.subr.bf16.mxu0 0
  %58 = vmatpush1.bf16.msra.mxu0 %v48
  %59 = vmatprep.subr.bf16.mxu0 0
  %60 = vmatpush1.bf16.msra.mxu0 0
  %61 = vmatprep.subr.bf16.mxu0 0
  %62 = vmatpush1.bf16.msra.mxu0 0
  %63 = vmatprep.subr.bf16.mxu0 0
  %64 = vmatpush1.bf16.msra.mxu0 0
  %65 = vmatprep.subr.bf16.mxu0 0
  %66 = vmatpush1.bf16.msra.mxu0 0
  %67 = vmatprep.subr.bf16.mxu0 0
  %68 = vmatpush1.bf16.msra.mxu0 0
  %69 = vmatprep.subr.bf16.mxu0 0
  %70 = vmatpush1.bf16.msra.mxu0 0
  %71 = vmatprep.subr.bf16.mxu0 0
  %72 = vmatpush1.bf16.msra.mxu0 0
  %73 = vmatprep.subr.bf16.mxu0 0
  %74 = vmatpush1.bf16.msra.mxu0 0
  %75 = vmatprep.subr.bf16.mxu0 0
  %76 = vmatpush1.bf16.msra.mxu0 0
  %77 = vmatprep.subr.bf16.mxu0 0
  %78 = vmatpush1.bf16.msra.mxu0 0
  %79 = vmatprep.subr.bf16.mxu0 0
  %80 = vmatpush1.bf16.msra.mxu0 0
  %81 = vmatprep.subr.bf16.mxu0 0
  %82 = vmatpush1.bf16.msra.mxu0 0
  %83 = vmatprep.subr.bf16.mxu0 0
  %84 = vmatpush1.bf16.msra.mxu0 0
  %85 = vmatprep.subr.bf16.mxu0 0
  %86 = vmatpush1.bf16.msra.mxu0 0
  %87 = vmatprep.mubr.bf16.mxu0 0
  %88 = vmatmul.mubr.bf16.gmra.mrb[0].mxu0 %v53
  %v89 = vpop.f32.mrb[0].mxu0
  %v90 = vadd.f32 %v37, %v89
  %v91 = vpop.f32.mrb[0].mxu0
  %v92 = vpop.f32.mrb[0].mxu0
  %v93 = vpop.f32.mrb[0].mxu0
  %94 = vdwg.mxu0
  %vm95 = vcmp.gt.f32.partialorder %v90, 0.0
  %v96 = vmul.f32 %v90, 0.01
  %v97 = vsel %vm95, %v90, %v96
  %v98 = vpack.c.bf16 %v97, %v97
  %v99 = vld [vmem:[%s3] sm:$0xf]
  %v100 = vld [vmem:[%s3 + $0x4] sm:$0xf]
  %v101 = vld [vmem:[%s3 + $0x8] sm:$0xf]
  %v102 = vld [vmem:[%s3 + $0xc] sm:$0xf]
  %v103 = vld [vmem:[%s3 + $0x10] sm:$0xf]
  %v104 = vld [vmem:[%s3 + $0x14] sm:$0xf]
  %v105 = vld [vmem:[%s3 + $0x18] sm:$0xf]
  %v106 = vld [vmem:[%s3 + $0x1c] sm:$0xf]
  %v107 = vld [vmem:[%s4] sm:$0x1]
  %v109 = vlaneseq
  %v110 = vshrl.u32 %v109, 7
  %v111 = vsub.s32 0, %v110
  %v112 = vrot.slane %v107, %v111
  %v122 = vunpack.c.l.b16 %v99
  %v123 = vunpack.c.l.b16 %v100
  %v124 = vunpack.c.l.b16 %v101
  %v125 = vunpack.c.l.b16 %v102
  %v126 = vunpack.c.l.b16 %v103
  %v127 = vunpack.c.l.b16 %v104
  %v128 = vunpack.c.l.b16 %v105
  %v129 = vunpack.c.l.b16 %v106
  %v130 = vpack.c.b16 %v123, %v122
  %v131 = vpack.c.b16 %v125, %v124
  %v132 = vpack.c.b16 %v127, %v126
  %v133 = vpack.c.b16 %v129, %v128
  %vm138 = vcmask 523264
  %v140 = vsel %vm138, %v98, 0
  %142 = vmatprep.subr.bf16.mxu0 0
  %143 = vmatpush1.bf16.msra.mxu0 %v130
  %144 = vmatprep.subr.bf16.mxu0 0
  %145 = vmatpush1.bf16.msra.mxu0 %v131
  %146 = vmatprep.subr.bf16.mxu0 0
  %147 = vmatpush1.bf16.msra.mxu0 %v132
  %148 = vmatprep.subr.bf16.mxu0 0
  %149 = vmatpush1.bf16.msra.mxu0 %v133
  %150 = vmatprep.subr.bf16.mxu0 0
  %151 = vmatpush1.bf16.msra.mxu0 0
  %152 = vmatprep.subr.bf16.mxu0 0
  %153 = vmatpush1.bf16.msra.mxu0 0
  %154 = vmatprep.subr.bf16.mxu0 0
  %155 = vmatpush1.bf16.msra.mxu0 0
  %156 = vmatprep.subr.bf16.mxu0 0
  %157 = vmatpush1.bf16.msra.mxu0 0
  %158 = vmatprep.subr.bf16.mxu0 0
  %159 = vmatpush1.bf16.msra.mxu0 0
  %160 = vmatprep.subr.bf16.mxu0 0
  %161 = vmatpush1.bf16.msra.mxu0 0
  %162 = vmatprep.subr.bf16.mxu0 0
  %163 = vmatpush1.bf16.msra.mxu0 0
  %164 = vmatprep.subr.bf16.mxu0 0
  %165 = vmatpush1.bf16.msra.mxu0 0
  %166 = vmatprep.subr.bf16.mxu0 0
  %167 = vmatpush1.bf16.msra.mxu0 0
  %168 = vmatprep.subr.bf16.mxu0 0
  %169 = vmatpush1.bf16.msra.mxu0 0
  %170 = vmatprep.subr.bf16.mxu0 0
  %171 = vmatpush1.bf16.msra.mxu0 0
  %172 = vmatprep.subr.bf16.mxu0 0
  %173 = vmatpush1.bf16.msra.mxu0 0
  %174 = vmatprep.mubr.bf16.mxu0 0
  %175 = vmatmul.mubr.bf16.gmra.mrb[0].mxu0 %v140
  %v176 = vpop.f32.mrb[0].mxu0
  %v177 = vadd.f32 %v112, %v176
  %v178 = vpop.f32.mrb[0].mxu0
  %v179 = vpop.f32.mrb[0].mxu0
  %v180 = vpop.f32.mrb[0].mxu0
  %181 = vdwg.mxu0
  %vm182 = vcmp.gt.f32.partialorder %v177, 0.0
  %v183 = vmul.f32 %v177, 0.01
  %v184 = vsel %vm182, %v177, %v183
  %v185 = vpack.c.bf16 %v184, %v184
  %v186 = vld [vmem:[%s5] sm:$0xf]
  %v187 = vld [vmem:[%s5 + $0x4] sm:$0xf]
  %v188 = vld [vmem:[%s5 + $0x8] sm:$0xf]
  %v189 = vld [vmem:[%s5 + $0xc] sm:$0xf]
  %v190 = vld [vmem:[%s5 + $0x10] sm:$0xf]
  %v191 = vld [vmem:[%s5 + $0x14] sm:$0xf]
  %v192 = vld [vmem:[%s5 + $0x18] sm:$0xf]
  %v193 = vld [vmem:[%s5 + $0x1c] sm:$0xf]
  %v194 = vld [vmem:[%s6] sm:$0x1]
  %v196 = vlaneseq
  %v197 = vshrl.u32 %v196, 7
  %v198 = vsub.s32 0, %v197
  %v199 = vrot.slane %v194, %v198
  %v209 = vunpack.c.l.b16 %v186
  %v210 = vunpack.c.l.b16 %v187
  %v211 = vunpack.c.l.b16 %v188
  %v212 = vunpack.c.l.b16 %v189
  %v213 = vunpack.c.l.b16 %v190
  %v214 = vunpack.c.l.b16 %v191
  %v215 = vunpack.c.l.b16 %v192
  %v216 = vunpack.c.l.b16 %v193
  %v217 = vpack.c.b16 %v210, %v209
  %v218 = vpack.c.b16 %v212, %v211
  %v219 = vpack.c.b16 %v214, %v213
  %v220 = vpack.c.b16 %v216, %v215
  %v226 = vsel %vm138, %v185, 0
  %228 = vmatprep.subr.bf16.mxu0 0
  %229 = vmatpush1.bf16.msra.mxu0 %v217
  %230 = vmatprep.subr.bf16.mxu0 0
  %231 = vmatpush1.bf16.msra.mxu0 %v218
  %232 = vmatprep.subr.bf16.mxu0 0
  %233 = vmatpush1.bf16.msra.mxu0 %v219
  %234 = vmatprep.subr.bf16.mxu0 0
  %235 = vmatpush1.bf16.msra.mxu0 %v220
  %236 = vmatprep.subr.bf16.mxu0 0
  %237 = vmatpush1.bf16.msra.mxu0 0
  %238 = vmatprep.subr.bf16.mxu0 0
  %239 = vmatpush1.bf16.msra.mxu0 0
  %240 = vmatprep.subr.bf16.mxu0 0
  %241 = vmatpush1.bf16.msra.mxu0 0
  %242 = vmatprep.subr.bf16.mxu0 0
  %243 = vmatpush1.bf16.msra.mxu0 0
  %244 = vmatprep.subr.bf16.mxu0 0
  %245 = vmatpush1.bf16.msra.mxu0 0
  %246 = vmatprep.subr.bf16.mxu0 0
  %247 = vmatpush1.bf16.msra.mxu0 0
  %248 = vmatprep.subr.bf16.mxu0 0
  %249 = vmatpush1.bf16.msra.mxu0 0
  %250 = vmatprep.subr.bf16.mxu0 0
  %251 = vmatpush1.bf16.msra.mxu0 0
  %252 = vmatprep.subr.bf16.mxu0 0
  %253 = vmatpush1.bf16.msra.mxu0 0
  %254 = vmatprep.subr.bf16.mxu0 0
  %255 = vmatpush1.bf16.msra.mxu0 0
  %256 = vmatprep.subr.bf16.mxu0 0
  %257 = vmatpush1.bf16.msra.mxu0 0
  %258 = vmatprep.subr.bf16.mxu0 0
  %259 = vmatpush1.bf16.msra.mxu0 0
  %260 = vmatprep.mubr.bf16.mxu0 0
  %261 = vmatmul.mubr.bf16.gmra.mrb[0].mxu0 %v226
  %v262 = vpop.f32.mrb[0].mxu0
  %v263 = vadd.f32 %v199, %v262
  %v264 = vpop.f32.mrb[0].mxu0
  %v265 = vpop.f32.mrb[0].mxu0
  %v266 = vpop.f32.mrb[0].mxu0
  %267 = vdwg.mxu0
  %v268 = vxor.u32 %v263, 2147483648
  %v269 = vmul.f32 %v268, 1.442695
  %v270 = vpow.pop %v269
  %v271 = vadd.f32 %v270, 1.0
  %v272 = vrcp.pop %v271
  %v273 = vmul.f32 1.0, %v272
  %vm274 = vcmask 41984
  %275 = vst.msk [vmem:[%s7] sm:$0x3] %vm274, %v273
  // Predicated region
  $region30: #{decoder_fc_pvp.3} parent=0 // pred_check
    _
  $region31: #{decoder_fc_pvp.3} parent=0 // pred_check_branch
    %277 = sbr.rel (0) target = $region33
  $region32: #{decoder_fc_pvp.3} parent=0 // pred_region
    _
  $region33: #{decoder_fc_pvp.3} parent=0 // pred_fallthru
    _
  // Predicated region
  $region34: #{decoder_fc_pvp.3} parent=0 // pred_check
    _
  $region35: #{decoder_fc_pvp.3} parent=0 // pred_check_branch
    %279 = sbr.rel (0) target = $region37
  $region36: #{decoder_fc_pvp.3} parent=0 // pred_region
    _
  $region37: #{decoder_fc_pvp.3} parent=0 // pred_fallthru
    _

// kernel: decoder_fc_pvp.2
$region0: #{decoder_fc_pvp.2}
  #allocation0 [shape = 'u32[]', space=smem, size = 0x4, offset = 0x4, fixed_abs, tag = 'smem constant byte address 0x4 - core index']
  #allocation1 [shape = 'u32[144,128]{1,0:T(1,128)}', space=vmem, size = 0x12000, scoped, tag = 'internal scratch']
  %s0 = inlined_call_operand.vmem [shape: bf16[2,32], index: 0, kind: input, shape index: {}]
  %s1 = inlined_call_operand.vmem [shape: bf16[32,64], index: 1, kind: input, shape index: {}]
  %s2 = inlined_call_operand.vmem [shape: f32[1,64], index: 2, kind: input, shape index: {}]
  %s3 = inlined_call_operand.vmem [shape: bf16[64,64], index: 3, kind: input, shape index: {}]
  %s4 = inlined_call_operand.vmem [shape: f32[1,64], index: 4, kind: input, shape index: {}]
  %s5 = inlined_call_operand.vmem [shape: bf16[64,768], index: 5, kind: input, shape index: {}]
  %s6 = inlined_call_operand.vmem [shape: f32[1,768], index: 6, kind: input, shape index: {}]
  %s7 = inlined_call_operand.hbm [shape: f32[2,768], index: 7, kind: output, shape index: {}]
  %s8 = sld [smem:[#allocation0]]
  $region87: #{decoder_fc_pvp.2} parent=0
    _
  %s10 = ssub.s32 1, %s8
  %s11 = scalar_select 0, %s10, %s8
  $region1: #{decoder_fc_pvp.2} parent=0
    #allocation2 [shape = 'u8[98304]{0}', space=vmem, size = 0x18000, scoped, tag = 'input window, operand 5']
    #allocation3 [shape = 'u8[6144]{0}', space=vmem, size = 0x1800, scoped, tag = 'output window, operand 0']
    #allocation4 [shape = 's32[2]{0}', space=sflag, size = 0x8, scoped, tag = 'scoped memory for decoder_fc_pvp.2']
    %12 = vsyncpa [#allocation4], 0
    %s13 = scalar_lea.sflag [#allocation4], 1
    %14 = vsyncpa %s13, 0
    loop: start=0, step=1, limit=4
    $region2: #{decoder_fc_pvp.2} parent=1 // loop_pre_header
      _
    $region3: #{decoder_fc_pvp.2} parent=1 // loop_header
      %s16 = sphi 0, %s20
      %p17 = scmp.ge.s32.totalorder %s16, 4
      %s24 = sphi 0, %s24
      %s26 = sphi 0, %s24
      %s27 = sphi 0, %s26
      %s41 = sphi 0, %s27
      %s45 = sphi 0, %s45
      %s47 = sphi 0, %s45
      %s48 = sphi 0, %s47
      %s62 = sphi 0, %s48
      %s66 = sphi 0, %s66
      %s68 = sphi 0, %s66
      %s69 = sphi 0, %s68
      %s83 = sphi 0, %s69
      %s87 = sphi 0, %s87
      %s89 = sphi 0, %s87
      %s90 = sphi 0, %s89
      %s104 = sphi 0, %s90
      %s108 = sphi 0, %s108
      %s110 = sphi 0, %s108
      %s111 = sphi 0, %s110
      %s125 = sphi 0, %s111
      %s131 = sphi 0, %s133
      %s134 = sphi 0, %s131
      %s135 = sphi 0, %s134
      %s151 = sphi 0, %s135
      %s157 = sphi 0, %s159
      %s160 = sphi 0, %s157
      %s161 = sphi 0, %s160
      %s177 = sphi 0, %s161
      %s183 = sphi 0, %s185
      %s186 = sphi 0, %s183
      %s187 = sphi 0, %s186
      %s203 = sphi 0, %s187
    $region4: #{decoder_fc_pvp.2} parent=1 // loop_header_branch
      %19 = sbr.rel (%p17) target = $region8
    $region5: #{decoder_fc_pvp.2} parent=1 // loop_body
      %s21 = ssub.s32 %s16, 1
      %s22 = ssub.s32 %s16, 2
      %s23 = sadd.s32 %s16, 1
      %s25 = sadd.s32 %s24, 1
      %p28 = scmp.eq.s32.totalorder %s16, 1
      %p29 = scmp.ne.s32.totalorder %s24, %s26
      %p30 = scmp.eq.s32.totalorder %s16, 0
      %p31 = por %p29, %p30
      %p32 = scmp.ne.s32.totalorder %s24, %s26
      %p33 = scmp.eq.s32.totalorder %s21, 1
      %p34 = por %p32, %p33
      %p35 = scmp.ne.s32.totalorder %s26, %s27
      %p36 = scmp.eq.s32.totalorder %s21, 0
      %p37 = por %p35, %p36
      %p38 = scmp.ne.s32.totalorder %s26, %s27
      %p39 = scmp.eq.s32.totalorder %s22, 1
      %p40 = por %p38, %p39
      %p42 = scmp.ne.s32.totalorder %s27, %s41
      %p43 = scmp.eq.s32.totalorder %s22, 0
      %p44 = por %p42, %p43
      %s46 = sadd.s32 %s45, 1
      %p49 = scmp.eq.s32.totalorder %s16, 1
      %p50 = scmp.ne.s32.totalorder %s45, %s47
      %p51 = scmp.eq.s32.totalorder %s16, 0
      %p52 = por %p50, %p51
      %p53 = scmp.ne.s32.totalorder %s45, %s47
      %p54 = scmp.eq.s32.totalorder %s21, 1
      %p55 = por %p53, %p54
      %p56 = scmp.ne.s32.totalorder %s47, %s48
      %p57 = scmp.eq.s32.totalorder %s21, 0
      %p58 = por %p56, %p57
      %p59 = scmp.ne.s32.totalorder %s47, %s48
      %p60 = scmp.eq.s32.totalorder %s22, 1
      %p61 = por %p59, %p60
      %p63 = scmp.ne.s32.totalorder %s48, %s62
      %p64 = scmp.eq.s32.totalorder %s22, 0
      %p65 = por %p63, %p64
      %s67 = sadd.s32 %s66, 1
      %p70 = scmp.eq.s32.totalorder %s16, 1
      %p71 = scmp.ne.s32.totalorder %s66, %s68
      %p72 = scmp.eq.s32.totalorder %s16, 0
      %p73 = por %p71, %p72
      %p74 = scmp.ne.s32.totalorder %s66, %s68
      %p75 = scmp.eq.s32.totalorder %s21, 1
      %p76 = por %p74, %p75
      %p77 = scmp.ne.s32.totalorder %s68, %s69
      %p78 = scmp.eq.s32.totalorder %s21, 0
      %p79 = por %p77, %p78
      %p80 = scmp.ne.s32.totalorder %s68, %s69
      %p81 = scmp.eq.s32.totalorder %s22, 1
      %p82 = por %p80, %p81
      %p84 = scmp.ne.s32.totalorder %s69, %s83
      %p85 = scmp.eq.s32.totalorder %s22, 0
      %p86 = por %p84, %p85
      %s88 = sadd.s32 %s87, 1
      %p91 = scmp.eq.s32.totalorder %s16, 1
      %p92 = scmp.ne.s32.totalorder %s87, %s89
      %p93 = scmp.eq.s32.totalorder %s16, 0
      %p94 = por %p92, %p93
      %p95 = scmp.ne.s32.totalorder %s87, %s89
      %p96 = scmp.eq.s32.totalorder %s21, 1
      %p97 = por %p95, %p96
      %p98 = scmp.ne.s32.totalorder %s89, %s90
      %p99 = scmp.eq.s32.totalorder %s21, 0
      %p100 = por %p98, %p99
      %p101 = scmp.ne.s32.totalorder %s89, %s90
      %p102 = scmp.eq.s32.totalorder %s22, 1
      %p103 = por %p101, %p102
      %p105 = scmp.ne.s32.totalorder %s90, %s104
      %p106 = scmp.eq.s32.totalorder %s22, 0
      %p107 = por %p105, %p106
      %s109 = sadd.s32 %s108, 1
      %p112 = scmp.eq.s32.totalorder %s16, 1
      %p113 = scmp.ne.s32.totalorder %s108, %s110
      %p114 = scmp.eq.s32.totalorder %s16, 0
      %p115 = por %p113, %p114
      %p116 = scmp.ne.s32.totalorder %s108, %s110
      %p117 = scmp.eq.s32.totalorder %s21, 1
      %p118 = por %p116, %p117
      %p119 = scmp.ne.s32.totalorder %s110, %s111
      %p120 = scmp.eq.s32.totalorder %s21, 0
      %p121 = por %p119, %p120
      %p122 = scmp.ne.s32.totalorder %s110, %s111
      %p123 = scmp.eq.s32.totalorder %s22, 1
      %p124 = por %p122, %p123
      %p126 = scmp.ne.s32.totalorder %s111, %s125
      %p127 = scmp.eq.s32.totalorder %s22, 0
      %p128 = por %p126, %p127
      %s129 = ssub.s32 %s16, %s23
      %p130 = scmp.eq.s32.totalorder %s129, 0
      %s132 = sadd.s32 %s131, 1
      %s133 = scalar_select %p130, %s131, %s132
      %p136 = pneg %p130
      %p137 = scmp.eq.s32.totalorder %s16, 1
      %p138 = por %p136, %p137
      %p139 = scmp.ne.s32.totalorder %s131, %s134
      %p140 = scmp.eq.s32.totalorder %s16, 0
      %p141 = por %p139, %p140
      %p142 = scmp.ne.s32.totalorder %s131, %s134
      %p143 = scmp.eq.s32.totalorder %s21, 1
      %p144 = por %p142, %p143
      %p145 = scmp.ne.s32.totalorder %s134, %s135
      %p146 = scmp.eq.s32.totalorder %s21, 0
      %p147 = por %p145, %p146
      %p148 = scmp.ne.s32.totalorder %s134, %s135
      %p149 = scmp.eq.s32.totalorder %s22, 1
      %p150 = por %p148, %p149
      %p152 = scmp.ne.s32.totalorder %s135, %s151
      %p153 = scmp.eq.s32.totalorder %s22, 0
      %p154 = por %p152, %p153
      %s155 = ssub.s32 %s16, %s23
      %p156 = scmp.eq.s32.totalorder %s155, 0
      %s158 = sadd.s32 %s157, 1
      %s159 = scalar_select %p156, %s157, %s158
      %p162 = pneg %p156
      %p163 = scmp.eq.s32.totalorder %s16, 1
      %p164 = por %p162, %p163
      %p165 = scmp.ne.s32.totalorder %s157, %s160
      %p166 = scmp.eq.s32.totalorder %s16, 0
      %p167 = por %p165, %p166
      %p168 = scmp.ne.s32.totalorder %s157, %s160
      %p169 = scmp.eq.s32.totalorder %s21, 1
      %p170 = por %p168, %p169
      %p171 = scmp.ne.s32.totalorder %s160, %s161
      %p172 = scmp.eq.s32.totalorder %s21, 0
      %p173 = por %p171, %p172
      %p174 = scmp.ne.s32.totalorder %s160, %s161
      %p175 = scmp.eq.s32.totalorder %s22, 1
      %p176 = por %p174, %p175
      %p178 = scmp.ne.s32.totalorder %s161, %s177
      %p179 = scmp.eq.s32.totalorder %s22, 0
      %p180 = por %p178, %p179
      %s181 = ssub.s32 %s16, %s23
      %p182 = scmp.eq.s32.totalorder %s181, 0
      %s184 = sadd.s32 %s183, 1
      %s185 = scalar_select %p182, %s183, %s184
      %p188 = pneg %p182
      %p189 = scmp.eq.s32.totalorder %s16, 1
      %p190 = por %p188, %p189
      %p191 = scmp.ne.s32.totalorder %s183, %s186
      %p192 = scmp.eq.s32.totalorder %s16, 0
      %p193 = por %p191, %p192
      %p194 = scmp.ne.s32.totalorder %s183, %s186
      %p195 = scmp.eq.s32.totalorder %s21, 1
      %p196 = por %p194, %p195
      %p197 = scmp.ne.s32.totalorder %s186, %s187
      %p198 = scmp.eq.s32.totalorder %s21, 0
      %p199 = por %p197, %p198
      %p200 = scmp.ne.s32.totalorder %s186, %s187
      %p201 = scmp.eq.s32.totalorder %s22, 1
      %p202 = por %p200, %p201
      %p204 = scmp.ne.s32.totalorder %s187, %s203
      %p205 = scmp.eq.s32.totalorder %s22, 0
      %p206 = por %p204, %p205
      %p207 = scmp.le.s32.totalorder 1, %s16
      %p208 = scmp.lt.s32.totalorder %s16, 3
      %p209 = pnand %p207, %p208
      %p210 = pneg %p209
      // Predicated region
      $region9: #{decoder_fc_pvp.2} parent=5 // pred_check
        _
      $region10: #{decoder_fc_pvp.2} parent=5 // pred_check_branch
        %212 = sbr.rel (%p209) target = $region12
      $region11: #{decoder_fc_pvp.2} parent=5 // pred_region
        %s213 = ssub.s32 %s16, 1
        // Predicated region
        $region13: #{decoder_fc_pvp.2} parent=11 // pred_check
          %p214 = pneg %p37
        $region14: #{decoder_fc_pvp.2} parent=11 // pred_check_branch
          %216 = sbr.rel (%p214) target = $region16
        $region15: #{decoder_fc_pvp.2} parent=11 // pred_region
          _
        $region16: #{decoder_fc_pvp.2} parent=11 // pred_fallthru
          _
        // Predicated region
        $region17: #{decoder_fc_pvp.2} parent=11 // pred_check
          %p217 = pneg %p58
        $region18: #{decoder_fc_pvp.2} parent=11 // pred_check_branch
          %219 = sbr.rel (%p217) target = $region20
        $region19: #{decoder_fc_pvp.2} parent=11 // pred_region
          _
        $region20: #{decoder_fc_pvp.2} parent=11 // pred_fallthru
          _
        // Predicated region
        $region21: #{decoder_fc_pvp.2} parent=11 // pred_check
          %p220 = pneg %p79
        $region22: #{decoder_fc_pvp.2} parent=11 // pred_check_branch
          %222 = sbr.rel (%p220) target = $region24
        $region23: #{decoder_fc_pvp.2} parent=11 // pred_region
          _
        $region24: #{decoder_fc_pvp.2} parent=11 // pred_fallthru
          _
        // Predicated region
        $region25: #{decoder_fc_pvp.2} parent=11 // pred_check
          %p223 = pneg %p100
        $region26: #{decoder_fc_pvp.2} parent=11 // pred_check_branch
          %225 = sbr.rel (%p223) target = $region28
        $region27: #{decoder_fc_pvp.2} parent=11 // pred_region
          _
        $region28: #{decoder_fc_pvp.2} parent=11 // pred_fallthru
          _
        // Predicated region
        $region29: #{decoder_fc_pvp.2} parent=11 // pred_check
          %p226 = pneg %p121
        $region30: #{decoder_fc_pvp.2} parent=11 // pred_check_branch
          %228 = sbr.rel (%p226) target = $region32
        $region31: #{decoder_fc_pvp.2} parent=11 // pred_region
          _
        $region32: #{decoder_fc_pvp.2} parent=11 // pred_fallthru
          _
      $region12: #{decoder_fc_pvp.2} parent=5 // pred_fallthru
        _
      %p229 = scmp.lt.s32.totalorder %s16, 2
      // Predicated region
      $region33: #{decoder_fc_pvp.2} parent=5 // pred_check
        %p230 = pneg %p229
      $region34: #{decoder_fc_pvp.2} parent=5 // pred_check_branch
        %232 = sbr.rel (%p230) target = $region36
      $region35: #{decoder_fc_pvp.2} parent=5 // pred_region
        // Predicated region
        $region37: #{decoder_fc_pvp.2} parent=35 // pred_check
          %p233 = pneg %p141
        $region38: #{decoder_fc_pvp.2} parent=35 // pred_check_branch
          %235 = sbr.rel (%p233) target = $region40
        $region39: #{decoder_fc_pvp.2} parent=35 // pred_region
          %s236 = sand.u32 %s131, 1
          %s237 = sand.u32 %s131, 1
          %s238 = smul.addr %s237, 96
          %s239 = scalar_lea.vmem [#allocation2], %s238
          %s240 = smul.u32 3, %s16
          %s241 = smul.addr %s240, 4
          %s242 = scalar_lea.vmem %s5, %s241
          // Predicated region
          $region41: #{decoder_fc_pvp.2} parent=39 // pred_check
            _
          $region42: #{decoder_fc_pvp.2} parent=39 // pred_check_branch
            %244 = sbr.rel (0) target = $region44
          $region43: #{decoder_fc_pvp.2} parent=39 // pred_region
            // Predicated region
            $region45: #{decoder_fc_pvp.2} parent=43 // pred_check
              _
            $region46: #{decoder_fc_pvp.2} parent=43 // pred_check_branch
              %246 = sbr.rel (0) target = $region48
            $region47: #{decoder_fc_pvp.2} parent=43 // pred_region
              %s247 = scalar_lea.vmem %s242, 8
              %s248 = scalar_lea.vmem %s239, 8 [#allocation2]
              loop: start=0, step=1, limit=1
              $region49: #{decoder_fc_pvp.2} parent=47 // loop_pre_header
                _
              $region50: #{decoder_fc_pvp.2} parent=47 // loop_header
                %s250 = sphi 0, %s254
                %p251 = scmp.ge.s32.totalorder %s250, 1
                %s255 = sphi %s242, %s242
                %s256 = sphi %s239, %s239
              $region51: #{decoder_fc_pvp.2} parent=47 // loop_header_branch
                %253 = sbr.rel (%p251) target = $region55
              $region52: #{decoder_fc_pvp.2} parent=47 // loop_body
                %v257 = vld [vmem:[%s255] sm:$0xff]
                %258 = vst [vmem:[%s256] sm:$0xff] %v257
                %v259 = vld [vmem:[%s255 + $0x18] sm:$0xff]
                %260 = vst [vmem:[%s256 + $0xc] sm:$0xff] %v259
                %v261 = vld [vmem:[%s255 + $0x30] sm:$0xff]
                %262 = vst [vmem:[%s256 + $0x18] sm:$0xff] %v261
                %v263 = vld [vmem:[%s255 + $0x48] sm:$0xff]
                %264 = vst [vmem:[%s256 + $0x24] sm:$0xff] %v263
                %v265 = vld [vmem:[%s255 + $0x60] sm:$0xff]
                %266 = vst [vmem:[%s256 + $0x30] sm:$0xff] %v265
                %v267 = vld [vmem:[%s255 + $0x78] sm:$0xff]
                %268 = vst [vmem:[%s256 + $0x3c] sm:$0xff] %v267
                %v269 = vld [vmem:[%s255 + $0x90] sm:$0xff]
                %270 = vst [vmem:[%s256 + $0x48] sm:$0xff] %v269
                %v271 = vld [vmem:[%s255 + $0xa8] sm:$0xff]
                %272 = vst [vmem:[%s256 + $0x54] sm:$0xff] %v271
              $region53: #{decoder_fc_pvp.2} parent=47 // loop_footer
                %s254 = sadd.s32 1, %s250
              $region54: #{decoder_fc_pvp.2} parent=47 // loop_footer_branch
                %249 = sbr.rel target = $region50
              $region55: #{decoder_fc_pvp.2} parent=47 // loop_exit
                _
              loop: start=0, step=1, limit=1
              $region56: #{decoder_fc_pvp.2} parent=47 // loop_pre_header
                _
              $region57: #{decoder_fc_pvp.2} parent=47 // loop_header
                %s275 = sphi 0, %s279
                %p276 = scmp.ge.s32.totalorder %s275, 1
                %s280 = sphi %s247, %s247
                %s281 = sphi %s248, %s248
              $region58: #{decoder_fc_pvp.2} parent=47 // loop_header_branch
                %278 = sbr.rel (%p276) target = $region62
              $region59: #{decoder_fc_pvp.2} parent=47 // loop_body
                %v282 = vld [vmem:[%s280] sm:$0xf]
                %283 = vst [vmem:[%s281] sm:$0xf] %v282
                %v284 = vld [vmem:[%s280 + $0x18] sm:$0xf]
                %285 = vst [vmem:[%s281 + $0xc] sm:$0xf] %v284
                %v286 = vld [vmem:[%s280 + $0x30] sm:$0xf]
                %287 = vst [vmem:[%s281 + $0x18] sm:$0xf] %v286
                %v288 = vld [vmem:[%s280 + $0x48] sm:$0xf]
                %289 = vst [vmem:[%s281 + $0x24] sm:$0xf] %v288
                %v290 = vld [vmem:[%s280 + $0x60] sm:$0xf]
                %291 = vst [vmem:[%s281 + $0x30] sm:$0xf] %v290
                %v292 = vld [vmem:[%s280 + $0x78] sm:$0xf]
                %293 = vst [vmem:[%s281 + $0x3c] sm:$0xf] %v292
                %v294 = vld [vmem:[%s280 + $0x90] sm:$0xf]
                %295 = vst [vmem:[%s281 + $0x48] sm:$0xf] %v294
                %v296 = vld [vmem:[%s280 + $0xa8] sm:$0xf]
                %297 = vst [vmem:[%s281 + $0x54] sm:$0xf] %v296
              $region60: #{decoder_fc_pvp.2} parent=47 // loop_footer
                %s279 = sadd.s32 1, %s275
              $region61: #{decoder_fc_pvp.2} parent=47 // loop_footer_branch
                %274 = sbr.rel target = $region57
              $region62: #{decoder_fc_pvp.2} parent=47 // loop_exit
                _
            $region48: #{decoder_fc_pvp.2} parent=43 // pred_fallthru
              _
          $region44: #{decoder_fc_pvp.2} parent=39 // pred_fallthru
            _
          %298 = vnop
        $region40: #{decoder_fc_pvp.2} parent=35 // pred_fallthru
          _
        // Predicated region
        $region63: #{decoder_fc_pvp.2} parent=35 // pred_check
          %p299 = pneg %p167
        $region64: #{decoder_fc_pvp.2} parent=35 // pred_check_branch
          %301 = sbr.rel (%p299) target = $region66
        $region65: #{decoder_fc_pvp.2} parent=35 // pred_region
          %s302 = smul.u32 3, %s16
          %p303 = scmp.lt.s32.totalorder %s302, 5
          %s304 = scalar_select %p303, %s302, 5
          %s305 = scalar_lea.vmem %s6, %s304
          %s306 = smul.u32 3, %s16
        $region66: #{decoder_fc_pvp.2} parent=35 // pred_fallthru
          _
      $region36: #{decoder_fc_pvp.2} parent=5 // pred_fallthru
        _
      %p307 = scmp.le.s32.totalorder 1, %s16
      %p308 = scmp.lt.s32.totalorder %s16, 3
      %p309 = pnand %p307, %p308
      %p310 = pneg %p309
      // Predicated region
      $region67: #{decoder_fc_pvp.2} parent=5 // pred_check
        _
      $region68: #{decoder_fc_pvp.2} parent=5 // pred_check_branch
        %312 = sbr.rel (%p309) target = $region70
      $region69: #{decoder_fc_pvp.2} parent=5 // pred_region
        %s313 = ssub.s32 %s16, 1
        %s314 = sand.u32 %s134, 1
        %s315 = sand.u32 %s134, 1
        %s316 = smul.addr %s315, 96
        %s317 = scalar_lea.vmem [#allocation2], %s316
        // Predicated region
        $region71: #{decoder_fc_pvp.2} parent=69 // pred_check
          %p318 = pneg %p147
        $region72: #{decoder_fc_pvp.2} parent=69 // pred_check_branch
          %320 = sbr.rel (%p318) target = $region74
        $region73: #{decoder_fc_pvp.2} parent=69 // pred_region
          _
        $region74: #{decoder_fc_pvp.2} parent=69 // pred_fallthru
          _
        %p321 = pneg %p37
        %p322 = pneg %p34
        %p323 = pneg %p58
        %p324 = pneg %p55
        %p325 = pneg %p79
        %p326 = pneg %p76
        %p327 = pneg %p100
        %p328 = pneg %p97
        %p329 = pneg %p121
        %p330 = pneg %p118
        %s331 = sand.u32 %s134, 1
        %s332 = sand.u32 %s134, 1
        %s333 = smul.addr %s332, 96
        %s334 = scalar_lea.vmem [#allocation2], %s333
        %p335 = pneg %p147
        %p336 = pneg %p144
        %s337 = smul.u32 3, %s21
        %p338 = scmp.lt.s32.totalorder %s337, 5
        %s339 = scalar_select %p338, %s337, 5
        %s340 = scalar_lea.vmem %s6, %s339
        %p341 = pneg %p173
        %p342 = pneg %p170
        %p343 = pneg %p199
        %p344 = pneg %p196
        %s345 = sand.u32 %s186, 1
        %s346 = scalar_lea.sflag [#allocation4], %s345
        %s347 = sand.u32 %s186, 1
        %s348 = smul.addr %s347, 6
        %s349 = scalar_lea.vmem [#allocation3], %s348
        %s350 = smul.u32 3, %s21
        %s351 = smul.u32 3, %s21
        %p352 = scmp.lt.s32.totalorder %s351, 5
        %s353 = scalar_select %p352, %s351, 5
        %s354 = scalar_lea.vmem %s6, %s353
        %s355 = smul.u32 3, %s21
        %s356 = smul.u32 3, %s21
        %v358 = vld [vmem:[%s0] sm:$0x1]
        %v359 = vld [vmem:[%s1] sm:$0xf]
        %v360 = vld [vmem:[%s1 + $0x4] sm:$0xf]
        %v361 = vld [vmem:[%s1 + $0x8] sm:$0xf]
        %v362 = vld [vmem:[%s1 + $0xc] sm:$0xf]
        %v363 = vld [vmem:[%s2] sm:$0x1]
        %v365 = vlaneseq
        %v366 = vshrl.u32 %v365, 7
        %v367 = vsub.s32 0, %v366
        %v368 = vrot.slane %v363, %v367
        %v374 = vunpack.c.l.b16 %v359
        %v375 = vunpack.c.l.b16 %v360
        %v376 = vunpack.c.l.b16 %v361
        %v377 = vunpack.c.l.b16 %v362
        %v378 = vpack.c.b16 %v375, %v374
        %v379 = vpack.c.b16 %v377, %v376
        %vm382 = vcmask 261120
        %v384 = vsel %vm382, %v358, 0
        %386 = vmatprep.subr.bf16.mxu0 0
        %387 = vmatpush1.bf16.msra.mxu0 %v378
        %388 = vmatprep.subr.bf16.mxu0 0
        %389 = vmatpush1.bf16.msra.mxu0 %v379
        %390 = vmatprep.subr.bf16.mxu0 0
        %391 = vmatpush1.bf16.msra.mxu0 0
        %392 = vmatprep.subr.bf16.mxu0 0
        %393 = vmatpush1.bf16.msra.mxu0 0
        %394 = vmatprep.subr.bf16.mxu0 0
        %395 = vmatpush1.bf16.msra.mxu0 0
        %396 = vmatprep.subr.bf16.mxu0 0
        %397 = vmatpush1.bf16.msra.mxu0 0
        %398 = vmatprep.subr.bf16.mxu0 0
        %399 = vmatpush1.bf16.msra.mxu0 0
        %400 = vmatprep.subr.bf16.mxu0 0
        %401 = vmatpush1.bf16.msra.mxu0 0
        %402 = vmatprep.subr.bf16.mxu0 0
        %403 = vmatpush1.bf16.msra.mxu0 0
        %404 = vmatprep.subr.bf16.mxu0 0
        %405 = vmatpush1.bf16.msra.mxu0 0
        %406 = vmatprep.subr.bf16.mxu0 0
        %407 = vmatpush1.bf16.msra.mxu0 0
        %408 = vmatprep.subr.bf16.mxu0 0
        %409 = vmatpush1.bf16.msra.mxu0 0
        %410 = vmatprep.subr.bf16.mxu0 0
        %411 = vmatpush1.bf16.msra.mxu0 0
        %412 = vmatprep.subr.bf16.mxu0 0
        %413 = vmatpush1.bf16.msra.mxu0 0
        %414 = vmatprep.subr.bf16.mxu0 0
        %415 = vmatpush1.bf16.msra.mxu0 0
        %416 = vmatprep.subr.bf16.mxu0 0
        %417 = vmatpush1.bf16.msra.mxu0 0
        %418 = vmatprep.mubr.bf16.mxu0 0
        %419 = vmatmul.mubr.bf16.gmra.mrb[0].mxu0 %v384
        %v420 = vpop.f32.mrb[0].mxu0
        %v421 = vadd.f32 %v368, %v420
        %v422 = vpop.f32.mrb[0].mxu0
        %v423 = vpop.f32.mrb[0].mxu0
        %v424 = vpop.f32.mrb[0].mxu0
        %425 = vdwg.mxu0
        %vm426 = vcmp.gt.f32.partialorder %v421, 0.0
        %v427 = vmul.f32 %v421, 0.01
        %v428 = vsel %vm426, %v421, %v427
        %v429 = vpack.c.bf16 %v428, %v428
        %v430 = vld [vmem:[%s3] sm:$0xf]
        %v431 = vld [vmem:[%s3 + $0x4] sm:$0xf]
        %v432 = vld [vmem:[%s3 + $0x8] sm:$0xf]
        %v433 = vld [vmem:[%s3 + $0xc] sm:$0xf]
        %v434 = vld [vmem:[%s3 + $0x10] sm:$0xf]
        %v435 = vld [vmem:[%s3 + $0x14] sm:$0xf]
        %v436 = vld [vmem:[%s3 + $0x18] sm:$0xf]
        %v437 = vld [vmem:[%s3 + $0x1c] sm:$0xf]
        %v438 = vld [vmem:[%s4] sm:$0x1]
        %v440 = vlaneseq
        %v441 = vshrl.u32 %v440, 7
        %v442 = vsub.s32 0, %v441
        %v443 = vrot.slane %v438, %v442
        %v453 = vunpack.c.l.b16 %v430
        %v454 = vunpack.c.l.b16 %v431
        %v455 = vunpack.c.l.b16 %v432
        %v456 = vunpack.c.l.b16 %v433
        %v457 = vunpack.c.l.b16 %v434
        %v458 = vunpack.c.l.b16 %v435
        %v459 = vunpack.c.l.b16 %v436
        %v460 = vunpack.c.l.b16 %v437
        %v461 = vpack.c.b16 %v454, %v453
        %v462 = vpack.c.b16 %v456, %v455
        %v463 = vpack.c.b16 %v458, %v457
        %v464 = vpack.c.b16 %v460, %v459
        %vm469 = vcmask 523264
        %v471 = vsel %vm469, %v429, 0
        %473 = vmatprep.subr.bf16.mxu0 0
        %474 = vmatpush1.bf16.msra.mxu0 %v461
        %475 = vmatprep.subr.bf16.mxu0 0
        %476 = vmatpush1.bf16.msra.mxu0 %v462
        %477 = vmatprep.subr.bf16.mxu0 0
        %478 = vmatpush1.bf16.msra.mxu0 %v463
        %479 = vmatprep.subr.bf16.mxu0 0
        %480 = vmatpush1.bf16.msra.mxu0 %v464
        %481 = vmatprep.subr.bf16.mxu0 0
        %482 = vmatpush1.bf16.msra.mxu0 0
        %483 = vmatprep.subr.bf16.mxu0 0
        %484 = vmatpush1.bf16.msra.mxu0 0
        %485 = vmatprep.subr.bf16.mxu0 0
        %486 = vmatpush1.bf16.msra.mxu0 0
        %487 = vmatprep.subr.bf16.mxu0 0
        %488 = vmatpush1.bf16.msra.mxu0 0
        %489 = vmatprep.subr.bf16.mxu0 0
        %490 = vmatpush1.bf16.msra.mxu0 0
        %491 = vmatprep.subr.bf16.mxu0 0
        %492 = vmatpush1.bf16.msra.mxu0 0
        %493 = vmatprep.subr.bf16.mxu0 0
        %494 = vmatpush1.bf16.msra.mxu0 0
        %495 = vmatprep.subr.bf16.mxu0 0
        %496 = vmatpush1.bf16.msra.mxu0 0
        %497 = vmatprep.subr.bf16.mxu0 0
        %498 = vmatpush1.bf16.msra.mxu0 0
        %499 = vmatprep.subr.bf16.mxu0 0
        %500 = vmatpush1.bf16.msra.mxu0 0
        %501 = vmatprep.subr.bf16.mxu0 0
        %502 = vmatpush1.bf16.msra.mxu0 0
        %503 = vmatprep.subr.bf16.mxu0 0
        %504 = vmatpush1.bf16.msra.mxu0 0
        %505 = vmatprep.mubr.bf16.mxu0 0
        %506 = vmatmul.mubr.bf16.gmra.mrb[0].mxu0 %v471
        %v507 = vpop.f32.mrb[0].mxu0
        %v508 = vadd.f32 %v443, %v507
        %v509 = vpop.f32.mrb[0].mxu0
        %v510 = vpop.f32.mrb[0].mxu0
        %v511 = vpop.f32.mrb[0].mxu0
        %512 = vdwg.mxu0
        %vm513 = vcmp.gt.f32.partialorder %v508, 0.0
        %v514 = vmul.f32 %v508, 0.01
        %v515 = vsel %vm513, %v508, %v514
        %v516 = vpack.c.bf16 %v515, %v515
        %v517 = vld [vmem:[%s317] sm:$0xff]
        %v518 = vld [vmem:[%s317 + $0x8] sm:$0xf]
        %v519 = vld [vmem:[%s317 + $0xc] sm:$0xff]
        %v520 = vld [vmem:[%s317 + $0x14] sm:$0xf]
        %v521 = vld [vmem:[%s317 + $0x18] sm:$0xff]
        %v522 = vld [vmem:[%s317 + $0x20] sm:$0xf]
        %v523 = vld [vmem:[%s317 + $0x24] sm:$0xff]
        %v524 = vld [vmem:[%s317 + $0x2c] sm:$0xf]
        %v525 = vld [vmem:[%s317 + $0x30] sm:$0xff]
        %v526 = vld [vmem:[%s317 + $0x38] sm:$0xf]
        %v527 = vld [vmem:[%s317 + $0x3c] sm:$0xff]
        %v528 = vld [vmem:[%s317 + $0x44] sm:$0xf]
        %v529 = vld [vmem:[%s317 + $0x48] sm:$0xff]
        %v530 = vld [vmem:[%s317 + $0x50] sm:$0xf]
        %v531 = vld [vmem:[%s317 + $0x54] sm:$0xff]
        %v532 = vld [vmem:[%s317 + $0x5c] sm:$0xf]
        %v533 = vld [vmem:[%s354] sm:$0x7]
        %v535 = vlaneseq
        %v536 = vshrl.u32 %v535, 7
        %v537 = vsub.s32 0, %v536
        %v538 = vrot.slane %v533, %v537
        %v539 = vlaneseq
        %v540 = vshrl.u32 %v539, 7
        %v541 = vsub.s32 1, %v540
        %v542 = vrot.slane %v533, %v541
        %v543 = vlaneseq
        %v544 = vshrl.u32 %v543, 7
        %v545 = vsub.s32 2, %v544
        %v546 = vrot.slane %v533, %v545
        %v566 = vunpack.c.l.b16 %v517
        %v567 = vunpack.c.h.b16 %v517
        %v568 = vunpack.c.l.b16 %v518
        %v569 = vunpack.c.l.b16 %v519
        %v570 = vunpack.c.h.b16 %v519
        %v571 = vunpack.c.l.b16 %v520
        %v572 = vunpack.c.l.b16 %v521
        %v573 = vunpack.c.h.b16 %v521
        %v574 = vunpack.c.l.b16 %v522
        %v575 = vunpack.c.l.b16 %v523
        %v576 = vunpack.c.h.b16 %v523
        %v577 = vunpack.c.l.b16 %v524
        %v578 = vunpack.c.l.b16 %v525
        %v579 = vunpack.c.h.b16 %v525
        %v580 = vunpack.c.l.b16 %v526
        %v581 = vunpack.c.l.b16 %v527
        %v582 = vunpack.c.h.b16 %v527
        %v583 = vunpack.c.l.b16 %v528
        %v584 = vunpack.c.l.b16 %v529
        %v585 = vunpack.c.h.b16 %v529
        %v586 = vunpack.c.l.b16 %v530
        %v587 = vunpack.c.l.b16 %v531
        %v588 = vunpack.c.h.b16 %v531
        %v589 = vunpack.c.l.b16 %v532
        %v590 = vpack.c.b16 %v569, %v566
        %v591 = vpack.c.b16 %v570, %v567
        %v592 = vpack.c.b16 %v571, %v568
        %v593 = vpack.c.b16 %v575, %v572
        %v594 = vpack.c.b16 %v576, %v573
        %v595 = vpack.c.b16 %v577, %v574
        %v596 = vpack.c.b16 %v581, %v578
        %v597 = vpack.c.b16 %v582, %v579
        %v598 = vpack.c.b16 %v583, %v580
        %v599 = vpack.c.b16 %v587, %v584
        %v600 = vpack.c.b16 %v588, %v585
        %v601 = vpack.c.b16 %v589, %v586
        %v615 = vsel %vm469, %v516, 0
        %617 = vmatprep.subr.bf16.mxu0 %v591
        %618 = vmatpush1.bf16.msra.mxu0 %v590
        %619 = vmatprep.subr.bf16.mxu0 %v594
        %620 = vmatpush1.bf16.msra.mxu0 %v593
        %621 = vmatprep.subr.bf16.mxu0 %v597
        %622 = vmatpush1.bf16.msra.mxu0 %v596
        %623 = vmatprep.subr.bf16.mxu0 %v600
        %624 = vmatpush1.bf16.msra.mxu0 %v599
        %625 = vmatprep.subr.bf16.mxu0 0
        %626 = vmatpush1.bf16.msra.mxu0 0
        %627 = vmatprep.subr.bf16.mxu0 0
        %628 = vmatpush1.bf16.msra.mxu0 0
        %629 = vmatprep.subr.bf16.mxu0 0
        %630 = vmatpush1.bf16.msra.mxu0 0
        %631 = vmatprep.subr.bf16.mxu0 0
        %632 = vmatpush1.bf16.msra.mxu0 0
        %633 = vmatprep.subr.bf16.mxu0 0
        %634 = vmatpush1.bf16.msra.mxu0 0
        %635 = vmatprep.subr.bf16.mxu0 0
        %636 = vmatpush1.bf16.msra.mxu0 0
        %637 = vmatprep.subr.bf16.mxu0 0
        %638 = vmatpush1.bf16.msra.mxu0 0
        %639 = vmatprep.subr.bf16.mxu0 0
        %640 = vmatpush1.bf16.msra.mxu0 0
        %641 = vmatprep.subr.bf16.mxu0 0
        %642 = vmatpush1.bf16.msra.mxu0 0
        %643 = vmatprep.subr.bf16.mxu0 0
        %644 = vmatpush1.bf16.msra.mxu0 0
        %645 = vmatprep.subr.bf16.mxu0 0
        %646 = vmatpush1.bf16.msra.mxu0 0
        %647 = vmatprep.subr.bf16.mxu0 0
        %648 = vmatpush1.bf16.msra.mxu0 0
        %649 = vmatprep.mubr.bf16.mxu0 0
        %650 = vmatmul.mubr.bf16.gmra.mrb[0].mxu0 %v615
        %v651 = vpop.f32.mrb[0].mxu0
        %v652 = vadd.f32 %v538, %v651
        %v653 = vpop.f32.mrb[0].mxu0
        %v654 = vadd.f32 %v542, %v653
        %v655 = vpop.f32.mrb[0].mxu0
        %v656 = vpop.f32.mrb[0].mxu0
        %657 = vdwg.mxu0
        %658 = vmatprep.subr.bf16.mxu0 0
        %659 = vmatpush1.bf16.msra.mxu0 %v592
        %660 = vmatprep.subr.bf16.mxu0 0
        %661 = vmatpush1.bf16.msra.mxu0 %v595
        %662 = vmatprep.subr.bf16.mxu0 0
        %663 = vmatpush1.bf16.msra.mxu0 %v598
        %664 = vmatprep.subr.bf16.mxu0 0
        %665 = vmatpush1.bf16.msra.mxu0 %v601
        %666 = vmatprep.subr.bf16.mxu0 0
        %667 = vmatpush1.bf16.msra.mxu0 0
        %668 = vmatprep.subr.bf16.mxu0 0
        %669 = vmatpush1.bf16.msra.mxu0 0
        %670 = vmatprep.subr.bf16.mxu0 0
        %671 = vmatpush1.bf16.msra.mxu0 0
        %672 = vmatprep.subr.bf16.mxu0 0
        %673 = vmatpush1.bf16.msra.mxu0 0
        %674 = vmatprep.subr.bf16.mxu0 0
        %675 = vmatpush1.bf16.msra.mxu0 0
        %676 = vmatprep.subr.bf16.mxu0 0
        %677 = vmatpush1.bf16.msra.mxu0 0
        %678 = vmatprep.subr.bf16.mxu0 0
        %679 = vmatpush1.bf16.msra.mxu0 0
        %680 = vmatprep.subr.bf16.mxu0 0
        %681 = vmatpush1.bf16.msra.mxu0 0
        %682 = vmatprep.subr.bf16.mxu0 0
        %683 = vmatpush1.bf16.msra.mxu0 0
        %684 = vmatprep.subr.bf16.mxu0 0
        %685 = vmatpush1.bf16.msra.mxu0 0
        %686 = vmatprep.subr.bf16.mxu0 0
        %687 = vmatpush1.bf16.msra.mxu0 0
        %688 = vmatprep.subr.bf16.mxu0 0
        %689 = vmatpush1.bf16.msra.mxu0 0
        %690 = vmatprep.mubr.bf16.mxu0 0
        %691 = vmatmul.mubr.bf16.gmra.mrb[0].mxu0 %v615
        %v692 = vpop.f32.mrb[0].mxu0
        %v693 = vadd.f32 %v546, %v692
        %v694 = vpop.f32.mrb[0].mxu0
        %v695 = vpop.f32.mrb[0].mxu0
        %v696 = vpop.f32.mrb[0].mxu0
        %697 = vdwg.mxu0
        %v698 = vxor.u32 %v652, 2147483648
        %v699 = vxor.u32 %v654, 2147483648
        %v700 = vxor.u32 %v693, 2147483648
        %v701 = vmul.f32 %v698, 1.442695
        %v702 = vpow.pop %v701
        %v703 = vmul.f32 %v699, 1.442695
        %v704 = vpow.pop %v703
        %v705 = vmul.f32 %v700, 1.442695
        %v706 = vpow.pop %v705
        %v707 = vadd.f32 %v702, 1.0
        %v708 = vadd.f32 %v704, 1.0
        %v709 = vadd.f32 %v706, 1.0
        %v710 = vrcp.pop %v707
        %v711 = vmul.f32 1.0, %v710
        %v712 = vrcp.pop %v708
        %v713 = vmul.f32 1.0, %v712
        %v714 = vrcp.pop %v709
        %v715 = vmul.f32 1.0, %v714
        %v719 = vcombine.low %v711, %v713
        %v721 = vunpack.c.l.s4 1983009808
        %v722 = vunpack.c.0.s8 %v721
        %v723 = vlaneseq
        %v724 = vshrl.u32 %v723, 7
        %v725 = vsub.s32 %v722, %v724
        %v726 = vrot.slane %v719, %v725
        %v728 = vunpack.c.l.s4 1983009808
        %v729 = vunpack.c.0.s8 %v728
        %v730 = vlaneseq
        %v731 = vshrl.u32 %v730, 7
        %v732 = vsub.s32 %v729, %v731
        %v733 = vrot.slane %v715, %v732
        %v734 = vcombine.low %v726, %v733
        %736 = vst [vmem:[%s349] sm:$0x3f] %v734
        %s737 = sand.u32 %s186, 1
        %s738 = scalar_lea.sflag [#allocation4], %s737
        %s739 = sand.u32 %s186, 1
        %s740 = smul.addr %s739, 6
        %s741 = scalar_lea.vmem [#allocation3], %s740
        // Predicated region
        $region75: #{decoder_fc_pvp.2} parent=69 // pred_check
          %p742 = pneg %p196
        $region76: #{decoder_fc_pvp.2} parent=69 // pred_check_branch
          %744 = sbr.rel (%p742) target = $region78
        $region77: #{decoder_fc_pvp.2} parent=69 // pred_region
          %s745 = smul.u32 3, %s21
          %s747 = ssub.s32 96, 96
          %748 = vsyncadd %s738, %s747
          %s749 = smul.addr %s745, 32
          %s750 = scalar_lea.hbm %s7, %s749
          %s752 = sshll.u32 %s741, 4
          %s753 = int_to_ptr.vmem [resolvable:$true] %s752
          %755 = dma.vmem_to_hbm [thread:$0]  %s753, 96, %s750, %s738
        $region78: #{decoder_fc_pvp.2} parent=69 // pred_fallthru
          _
      $region70: #{decoder_fc_pvp.2} parent=5 // pred_fallthru
        _
      %p756 = scmp.le.s32.totalorder 2, %s16
      // Predicated region
      $region79: #{decoder_fc_pvp.2} parent=5 // pred_check
        %p757 = pneg %p756
      $region80: #{decoder_fc_pvp.2} parent=5 // pred_check_branch
        %759 = sbr.rel (%p757) target = $region82
      $region81: #{decoder_fc_pvp.2} parent=5 // pred_region
        %s760 = ssub.s32 %s16, 2
        // Predicated region
        $region83: #{decoder_fc_pvp.2} parent=81 // pred_check
          %p761 = pneg %p202
        $region84: #{decoder_fc_pvp.2} parent=81 // pred_check_branch
          %763 = sbr.rel (%p761) target = $region86
        $region85: #{decoder_fc_pvp.2} parent=81 // pred_region
          %s764 = sand.u32 %s187, 1
          %s765 = scalar_lea.sflag [#allocation4], %s764
          %s766 = sand.u32 %s187, 1
          %s767 = smul.addr %s766, 6
          %s768 = scalar_lea.vmem [#allocation3], %s767
          %769 = dma.done %s765, 96
        $region86: #{decoder_fc_pvp.2} parent=81 // pred_fallthru
          _
      $region82: #{decoder_fc_pvp.2} parent=5 // pred_fallthru
        _
    $region6: #{decoder_fc_pvp.2} parent=1 // loop_footer
      %s20 = sadd.s32 1, %s16
    $region7: #{decoder_fc_pvp.2} parent=1 // loop_footer_branch
      %15 = sbr.rel target = $region3
    $region8: #{decoder_fc_pvp.2} parent=1 // loop_exit
      _
    %770 = vsyncpa [#allocation4], 1
    %s771 = scalar_lea.sflag [#allocation4], 1
    %772 = vsyncpa %s771, 1

</llo_original>
